<compile_context>
chip_gen: v5e
topology: v5e:2x2
jax: 0.10.0
libtpu: 0.0.40
codegen_flags: <defaults>
</compile_context>

<pallas_src>
import jax
import jax.numpy as jnp
from jax.experimental import pallas as pl
from jax.experimental.pallas import tpu as pltpu

# ---- model dimensions (hidden_size fixed to 8 per the module; others are synthetic) ----
BATCH = 4
INPUT_SIZE = 32
HIDDEN_SIZE = 8
OUTPUT_SIZE = 16

# Batch-tile cap (lane axis). Per step: x (32,TB) bf16 + out (16,TB) f32 ~= TB*128 B;
# double-buffered at TB=4096 that's ~1 MiB -- comfortably under the 32 MiB scoped-VMEM
# default on v7x and the 128 MiB physical VMEM on v5e/v6e.
MAX_BATCH_TILE = 4096


def mlp_softmax_kernel(x_ref, w1_ref, b1_ref, w2_ref, b2_ref, w3_ref, b3_ref, o_ref):
    # x streamed as bf16 (HBM traffic), promoted to f32 for compute (v5e has no bf16 VPU/EUP).
    x = x_ref[...].astype(jnp.float32)                               # (INPUT, TB)

    # fc1 + relu : (HIDDEN, TB)
    h1 = jnp.dot(w1_ref[...], x, preferred_element_type=jnp.float32) + b1_ref[...]
    h1 = jnp.maximum(h1, 0.0)

    # fc2 + relu : (HIDDEN, TB)
    h2 = jnp.dot(w2_ref[...], h1, preferred_element_type=jnp.float32) + b2_ref[...]
    h2 = jnp.maximum(h2, 0.0)

    # fc3 : (OUTPUT, TB)
    logits = jnp.dot(w3_ref[...], h2, preferred_element_type=jnp.float32) + b3_ref[...]

    # softmax over the class axis (= dim=1 of the original (B, C) layout; here axis 0,
    # a 16-sublane XLU reduction). Exact divide so rows sum to 1 within f32 rounding.
    m = jnp.max(logits, axis=0, keepdims=True)
    e = jnp.exp(logits - m)
    denom = jnp.sum(e, axis=0, keepdims=True)
    o_ref[...] = (e / denom).astype(o_ref.dtype)


def _pick_batch_tile(B):
    """Batch (lane-axis) tile.

    Small batches: one full-extent block (always a legal BlockSpec). Large batches: the largest
    multiple-of-128 tile <= MAX_BATCH_TILE, clamped to ~B/2 so there are >= 2 grid steps for
    dual-TC sharding on v7x. A ragged final block is masked by Pallas.
    """
    if B <= 256:
        return B
    half = -(-B // 2)                       # ceil(B / 2)
    half_128 = ((half + 127) // 128) * 128  # round up to lane multiple
    return min(MAX_BATCH_TILE, half_128)


def neural_net_forward(x, params, *, stream_dtype=jnp.bfloat16):
    """x: (B, INPUT_SIZE) f32. params: PyTorch nn.Linear layout — W: (out, in), b: (out,)."""
    w1, b1, w2, b2, w3, b3 = params
    B = x.shape[0]
    TB = _pick_batch_tile(B)

    # Wrapper-side layout plumbing: batch onto the lane axis, bf16 streaming for x,
    # biases as (out, 1) columns that broadcast across lanes.
    xt = x.T.astype(stream_dtype)                                    # (INPUT_SIZE, B)
    b1c = b1.reshape(-1, 1).astype(jnp.float32)
    b2c = b2.reshape(-1, 1).astype(jnp.float32)
    b3c = b3.reshape(-1, 1).astype(jnp.float32)

    # Full-array blocks with constant index_map -> stay VMEM-resident across grid steps.
    resident = lambda arr: pl.BlockSpec(arr.shape, lambda i: (0, 0))

    flops = 2 * B * (INPUT_SIZE * HIDDEN_SIZE + HIDDEN_SIZE * HIDDEN_SIZE + HIDDEN_SIZE * OUTPUT_SIZE)
    bytes_accessed = B * (INPUT_SIZE * 2 + OUTPUT_SIZE * 4) + 4 * (
        w1.size + b1.size + w2.size + b2.size + w3.size + b3.size)

    out_t = pl.pallas_call(
        mlp_softmax_kernel,
        out_shape=jax.ShapeDtypeStruct((OUTPUT_SIZE, B), jnp.float32),
        grid=(pl.cdiv(B, TB),),
        in_specs=[
            pl.BlockSpec((INPUT_SIZE, TB), lambda i: (0, i)),        # x^T: tiled along batch (lanes)
            resident(w1), resident(b1c),
            resident(w2), resident(b2c),
            resident(w3), resident(b3c),
        ],
        out_specs=pl.BlockSpec((OUTPUT_SIZE, TB), lambda i: (0, i)),
        compiler_params=pltpu.CompilerParams(
            dimension_semantics=("parallel",),   # shard batch across v7x's 2 TCs; no-op on v5e/v6e
        ),
        cost_estimate=pl.CostEstimate(
            flops=flops,
            transcendentals=B * OUTPUT_SIZE,
            bytes_accessed=bytes_accessed,
        ),
    )(xt, w1, b1c, w2, b2c, w3, b3c)

    return out_t.T                                                   # back to (B, OUTPUT_SIZE)


def init_params(key):
    """Deterministic init mimicking PyTorch nn.Linear default: U(-1/sqrt(fan_in), 1/sqrt(fan_in)).
    Weights in PyTorch layout (out_features, in_features)."""
    ks = jax.random.split(key, 6)

    def linear(kw, kb, fan_in, fan_out):
        bound = 1.0 / jnp.sqrt(fan_in)
        w = jax.random.uniform(kw, (fan_out, fan_in), jnp.float32, -bound, bound)
        b = jax.random.uniform(kb, (fan_out,), jnp.float32, -bound, bound)
        return w, b

    w1, b1 = linear(ks[0], ks[1], INPUT_SIZE, HIDDEN_SIZE)
    w2, b2 = linear(ks[2], ks[3], HIDDEN_SIZE, HIDDEN_SIZE)
    w3, b3 = linear(ks[4], ks[5], HIDDEN_SIZE, OUTPUT_SIZE)
    return (w1, b1, w2, b2, w3, b3)


if __name__ == "__main__":
    key = jax.random.PRNGKey(0)
    k_x, k_p = jax.random.split(key)

    x = jax.random.normal(k_x, (BATCH, INPUT_SIZE), dtype=jnp.float32)
    params = init_params(k_p)

    out = neural_net_forward(x, params)
    out = jax.block_until_ready(out)

    # Reference in plain JAX (with the same bf16 input streaming the kernel uses).
    w1, b1, w2, b2, w3, b3 = params
    xs = x.astype(jnp.bfloat16).astype(jnp.float32)
    h = jnp.maximum(xs @ w1.T + b1, 0.0)
    h = jnp.maximum(h @ w2.T + b2, 0.0)
    ref = jax.nn.softmax(h @ w3.T + b3, axis=1)

    assert out.shape == (BATCH, OUTPUT_SIZE)
    row_sums = jnp.sum(out, axis=1)
    assert bool(jnp.all(jnp.abs(row_sums - 1.0) < 1e-5)), row_sums   # exact divide -> ~f32 eps
    assert bool(jnp.max(jnp.abs(out - ref)) < 1e-3), jnp.max(jnp.abs(out - ref))

    print("KERNEL_OK")
</pallas_src>

<mosaic_0001>
module attributes {stable_mosaic.version = 11 : i64} {
  func.func @mlp_softmax_kernel(%arg0: i32, %arg1: memref<32x4xbf16, #tpu.memory_space<vmem>>, %arg2: memref<8x32xf32, #tpu.memory_space<vmem>>, %arg3: memref<8x1xf32, #tpu.memory_space<vmem>>, %arg4: memref<8x8xf32, #tpu.memory_space<vmem>>, %arg5: memref<8x1xf32, #tpu.memory_space<vmem>>, %arg6: memref<16x8xf32, #tpu.memory_space<vmem>>, %arg7: memref<16x1xf32, #tpu.memory_space<vmem>>, %arg8: memref<16x4xf32, #tpu.memory_space<vmem>>) attributes {dimension_semantics = [#tpu.dimension_semantics<parallel>], iteration_bounds = array<i64: 1>, scalar_prefetch = 0 : i64, scratch_operands = 0 : i64, tpu.core_type = #tpu.core_type<tc>, window_params = [{transform_indices = @transform_0, window_bounds = array<i64: 32, 4>}, {pipeline_mode = #tpu.pipeline_mode<synchronous>, transform_indices = @transform_1, window_bounds = array<i64: 8, 32>}, {pipeline_mode = #tpu.pipeline_mode<synchronous>, transform_indices = @transform_2, window_bounds = array<i64: 8, 1>}, {pipeline_mode = #tpu.pipeline_mode<synchronous>, transform_indices = @transform_3, window_bounds = array<i64: 8, 8>}, {pipeline_mode = #tpu.pipeline_mode<synchronous>, transform_indices = @transform_4, window_bounds = array<i64: 8, 1>}, {pipeline_mode = #tpu.pipeline_mode<synchronous>, transform_indices = @transform_5, window_bounds = array<i64: 16, 8>}, {pipeline_mode = #tpu.pipeline_mode<synchronous>, transform_indices = @transform_6, window_bounds = array<i64: 16, 1>}, {transform_indices = @transform_7, window_bounds = array<i64: 16, 4>}]} {
    %c0 = arith.constant 0 : index
    %c0_0 = arith.constant 0 : index
    %0 = vector.load %arg1[%c0, %c0_0] : memref<32x4xbf16, #tpu.memory_space<vmem>>, vector<32x4xbf16>
    %1 = arith.extf %0 : vector<32x4xbf16> to vector<32x4xf32>
    %c0_1 = arith.constant 0 : index
    %c0_2 = arith.constant 0 : index
    %2 = vector.load %arg2[%c0_1, %c0_2] : memref<8x32xf32, #tpu.memory_space<vmem>>, vector<8x32xf32>
    %cst = arith.constant dense<0.000000e+00> : vector<8x4xf32>
    %3 = tpu.matmul %2, %1, %cst {dimension_numbers = #tpu.dot_dimension_numbers<[1], [0], [0], [1], [0, 0, 1, 1], [], []>} : vector<8x32xf32>, vector<32x4xf32>, vector<8x4xf32> -> vector<8x4xf32>
    %c0_3 = arith.constant 0 : index
    %c0_4 = arith.constant 0 : index
    %4 = vector.load %arg3[%c0_3, %c0_4] : memref<8x1xf32, #tpu.memory_space<vmem>>, vector<8x1xf32>
    %5 = vector.broadcast %4 : vector<8x1xf32> to vector<8x4xf32>
    %6 = arith.addf %3, %5 : vector<8x4xf32>
    %cst_5 = arith.constant 0.000000e+00 : f32
    %7 = vector.broadcast %cst_5 : f32 to vector<8x4xf32>
    %8 = arith.maximumf %6, %7 : vector<8x4xf32>
    %c0_6 = arith.constant 0 : index
    %c0_7 = arith.constant 0 : index
    %9 = vector.load %arg4[%c0_6, %c0_7] : memref<8x8xf32, #tpu.memory_space<vmem>>, vector<8x8xf32>
    %cst_8 = arith.constant dense<0.000000e+00> : vector<8x4xf32>
    %10 = tpu.matmul %9, %8, %cst_8 {dimension_numbers = #tpu.dot_dimension_numbers<[1], [0], [0], [1], [0, 0, 1, 1], [], []>} : vector<8x8xf32>, vector<8x4xf32>, vector<8x4xf32> -> vector<8x4xf32>
    %c0_9 = arith.constant 0 : index
    %c0_10 = arith.constant 0 : index
    %11 = vector.load %arg5[%c0_9, %c0_10] : memref<8x1xf32, #tpu.memory_space<vmem>>, vector<8x1xf32>
    %12 = vector.broadcast %11 : vector<8x1xf32> to vector<8x4xf32>
    %13 = arith.addf %10, %12 : vector<8x4xf32>
    %cst_11 = arith.constant 0.000000e+00 : f32
    %14 = vector.broadcast %cst_11 : f32 to vector<8x4xf32>
    %15 = arith.maximumf %13, %14 : vector<8x4xf32>
    %c0_12 = arith.constant 0 : index
    %c0_13 = arith.constant 0 : index
    %16 = vector.load %arg6[%c0_12, %c0_13] : memref<16x8xf32, #tpu.memory_space<vmem>>, vector<16x8xf32>
    %cst_14 = arith.constant dense<0.000000e+00> : vector<16x4xf32>
    %17 = tpu.matmul %16, %15, %cst_14 {dimension_numbers = #tpu.dot_dimension_numbers<[1], [0], [0], [1], [0, 0, 1, 1], [], []>} : vector<16x8xf32>, vector<8x4xf32>, vector<16x4xf32> -> vector<16x4xf32>
    %c0_15 = arith.constant 0 : index
    %c0_16 = arith.constant 0 : index
    %18 = vector.load %arg7[%c0_15, %c0_16] : memref<16x1xf32, #tpu.memory_space<vmem>>, vector<16x1xf32>
    %19 = vector.broadcast %18 : vector<16x1xf32> to vector<16x4xf32>
    %20 = arith.addf %17, %19 : vector<16x4xf32>
    %cst_17 = arith.constant dense<0xFF800000> : vector<4xf32>
    %21 = vector.multi_reduction <maximumf>, %20, %cst_17 [0] : vector<16x4xf32> to vector<4xf32>
    %22 = vector.shape_cast %21 : vector<4xf32> to vector<1x4xf32>
    %23 = vector.broadcast %22 : vector<1x4xf32> to vector<16x4xf32>
    %24 = arith.subf %20, %23 : vector<16x4xf32>
    %25 = math.exp %24 : vector<16x4xf32>
    %cst_18 = arith.constant dense<0.000000e+00> : vector<4xf32>
    %26 = vector.multi_reduction <add>, %25, %cst_18 [0] : vector<16x4xf32> to vector<4xf32>
    %27 = vector.shape_cast %26 : vector<4xf32> to vector<1x4xf32>
    %28 = vector.broadcast %27 : vector<1x4xf32> to vector<16x4xf32>
    %29 = arith.divf %25, %28 : vector<16x4xf32>
    %c0_19 = arith.constant 0 : index
    %c0_20 = arith.constant 0 : index
    %30 = vector.load %arg8[%c0_19, %c0_20] : memref<16x4xf32, #tpu.memory_space<vmem>>, vector<16x4xf32>
    tpu.vector_store %arg8[%c0_19, %c0_20], %29 {strides = array<i32>} : memref<16x4xf32, #tpu.memory_space<vmem>>, vector<16x4xf32>,
    return
  }
  func.func @transform_0(%arg0: i32) -> (i32, i32) {
    %c0_i32 = arith.constant 0 : i32
    %c0_i32_0 = arith.constant 0 : i32
    return %c0_i32, %arg0 : i32, i32
  }
  func.func @transform_1(%arg0: i32) -> (i32, i32) {
    %c0_i32 = arith.constant 0 : i32
    %c0_i32_0 = arith.constant 0 : i32
    %c0_i32_1 = arith.constant 0 : i32
    return %c0_i32, %c0_i32_0 : i32, i32
  }
  func.func @transform_2(%arg0: i32) -> (i32, i32) {
    %c0_i32 = arith.constant 0 : i32
    %c0_i32_0 = arith.constant 0 : i32
    %c0_i32_1 = arith.constant 0 : i32
    return %c0_i32, %c0_i32_0 : i32, i32
  }
  func.func @transform_3(%arg0: i32) -> (i32, i32) {
    %c0_i32 = arith.constant 0 : i32
    %c0_i32_0 = arith.constant 0 : i32
    %c0_i32_1 = arith.constant 0 : i32
    return %c0_i32, %c0_i32_0 : i32, i32
  }
  func.func @transform_4(%arg0: i32) -> (i32, i32) {
    %c0_i32 = arith.constant 0 : i32
    %c0_i32_0 = arith.constant 0 : i32
    %c0_i32_1 = arith.constant 0 : i32
    return %c0_i32, %c0_i32_0 : i32, i32
  }
  func.func @transform_5(%arg0: i32) -> (i32, i32) {
    %c0_i32 = arith.constant 0 : i32
    %c0_i32_0 = arith.constant 0 : i32
    %c0_i32_1 = arith.constant 0 : i32
    return %c0_i32, %c0_i32_0 : i32, i32
  }
  func.func @transform_6(%arg0: i32) -> (i32, i32) {
    %c0_i32 = arith.constant 0 : i32
    %c0_i32_0 = arith.constant 0 : i32
    %c0_i32_1 = arith.constant 0 : i32
    return %c0_i32, %c0_i32_0 : i32, i32
  }
  func.func @transform_7(%arg0: i32) -> (i32, i32) {
    %c0_i32 = arith.constant 0 : i32
    %c0_i32_0 = arith.constant 0 : i32
    return %c0_i32, %arg0 : i32, i32
  }
}

</mosaic_0001>

<llo_original>
// kernel: tpu_custom_call.1
$region0: #{tpu_custom_call.1}
  #allocation0 [shape = 'u32[]', space=smem, size = 0x4, offset = 0x4, fixed_abs, tag = 'smem constant byte address 0x4 - core index']
  #allocation1 [shape = 'u32[72,128]{1,0:T(1,128)}', space=vmem, size = 0x9000, scoped, tag = 'internal scratch']
  %s0 = inlined_call_operand.vmem [shape: bf16[32,4], index: 0, kind: input, shape index: {}]
  %s1 = inlined_call_operand.vmem [shape: f32[8,32], index: 1, kind: input, shape index: {}]
  %s2 = inlined_call_operand.vmem [shape: f32[8,1], index: 2, kind: input, shape index: {}]
  %s3 = inlined_call_operand.vmem [shape: f32[8,8], index: 3, kind: input, shape index: {}]
  %s4 = inlined_call_operand.vmem [shape: f32[8,1], index: 4, kind: input, shape index: {}]
  %s5 = inlined_call_operand.vmem [shape: f32[16,8], index: 5, kind: input, shape index: {}]
  %s6 = inlined_call_operand.vmem [shape: f32[16,1], index: 6, kind: input, shape index: {}]
  %s7 = inlined_call_operand.vmem [shape: f32[16,4], index: 7, kind: output, shape index: {}]
  %s8 = sld [smem:[#allocation0]]
  $region38: #{tpu_custom_call.1} parent=0
    _
  %s10 = ssub.s32 1, %s8
  %s11 = scalar_select 0, %s10, %s8
  // Predicated region
  $region2: #{tpu_custom_call.1} parent=0 // pred_check
    _
  $region3: #{tpu_custom_call.1} parent=0 // pred_check_branch
    %13 = sbr.rel (0) target = $region5
  $region4: #{tpu_custom_call.1} parent=0 // pred_region
    _
  $region5: #{tpu_custom_call.1} parent=0 // pred_fallthru
    _
  // Predicated region
  $region6: #{tpu_custom_call.1} parent=0 // pred_check
    _
  $region7: #{tpu_custom_call.1} parent=0 // pred_check_branch
    %15 = sbr.rel (0) target = $region9
  $region8: #{tpu_custom_call.1} parent=0 // pred_region
    _
  $region9: #{tpu_custom_call.1} parent=0 // pred_fallthru
    _
  // Predicated region
  $region10: #{tpu_custom_call.1} parent=0 // pred_check
    _
  $region11: #{tpu_custom_call.1} parent=0 // pred_check_branch
    %17 = sbr.rel (0) target = $region13
  $region12: #{tpu_custom_call.1} parent=0 // pred_region
    _
  $region13: #{tpu_custom_call.1} parent=0 // pred_fallthru
    _
  // Predicated region
  $region14: #{tpu_custom_call.1} parent=0 // pred_check
    _
  $region15: #{tpu_custom_call.1} parent=0 // pred_check_branch
    %19 = sbr.rel (0) target = $region17
  $region16: #{tpu_custom_call.1} parent=0 // pred_region
    _
  $region17: #{tpu_custom_call.1} parent=0 // pred_fallthru
    _
  // Predicated region
  $region18: #{tpu_custom_call.1} parent=0 // pred_check
    _
  $region19: #{tpu_custom_call.1} parent=0 // pred_check_branch
    %21 = sbr.rel (0) target = $region21
  $region20: #{tpu_custom_call.1} parent=0 // pred_region
    _
  $region21: #{tpu_custom_call.1} parent=0 // pred_fallthru
    _
  // Predicated region
  $region22: #{tpu_custom_call.1} parent=0 // pred_check
    _
  $region23: #{tpu_custom_call.1} parent=0 // pred_check_branch
    %23 = sbr.rel (0) target = $region25
  $region24: #{tpu_custom_call.1} parent=0 // pred_region
    _
  $region25: #{tpu_custom_call.1} parent=0 // pred_fallthru
    _
  // Predicated region
  $region26: #{tpu_custom_call.1} parent=0 // pred_check
    _
  $region27: #{tpu_custom_call.1} parent=0 // pred_check_branch
    %25 = sbr.rel (0) target = $region29
  $region28: #{tpu_custom_call.1} parent=0 // pred_region
    _
  $region29: #{tpu_custom_call.1} parent=0 // pred_fallthru
    _
  %v26 = vld [vmem:[%s0] sm:$0xf]
  %v27 = vld [vmem:[%s0 + $0x4] sm:$0xf]
  %v28 = vld [vmem:[%s0 + $0x8] sm:$0xf]
  %v29 = vld [vmem:[%s0 + $0xc] sm:$0xf]
  %v30 = vunpack.c.l.bf16 %v26
  %v31 = vunpack.c.l.bf16 %v27
  %v32 = vunpack.c.l.bf16 %v28
  %v33 = vunpack.c.l.bf16 %v29
  %v34 = vld [vmem:[%s1] sm:$0xff]
  %v35 = vld [vmem:[%s2] sm:$0xff]
  %37 = vset.pattern.permute.xlu0 0
  %38 = vperm.xlu0 %37, %v35
  %v39 = vpop.permute.xlu0 %38
  %vm41 = vcmask 261120
  %v43 = vsel %vm41, %v34, 0
  %45 = vmatpush.msra.mxu0 0.0
  %46 = vmatpush.msra.mxu0 0.0
  %47 = vmatpush.msra.mxu0 0.0
  %48 = vmatpush.msra.mxu0 0.0
  %49 = vmatpush.msra.mxu0 0.0
  %50 = vmatpush.msra.mxu0 0.0
  %51 = vmatpush.msra.mxu0 0.0
  %52 = vmatpush.msra.mxu0 0.0
  %53 = vmatpush.msra.mxu0 0.0
  %54 = vmatpush.msra.mxu0 0.0
  %55 = vmatpush.msra.mxu0 0.0
  %56 = vmatpush.msra.mxu0 0.0
  %57 = vmatpush.msra.mxu0 %v33
  %58 = vmatpush.msra.mxu0 %v32
  %59 = vmatpush.msra.mxu0 %v31
  %60 = vmatpush.msra.mxu0 %v30
  %61 = vmatmul.f32.gmra.mxu0 %v43
  %v62 = vpop.f32.mrf.mxu0
  %v63 = vadd.f32 %v39, %v62
  %64 = vdwg.mxu0
  %v65 = vmax.f32 %v63, 0.0
  %v66 = vld [vmem:[%s3] sm:$0xff]
  %v67 = vld [vmem:[%s4] sm:$0xff]
  %69 = vset.pattern.permute.xlu0 0
  %70 = vperm.xlu0 %69, %v67
  %v71 = vpop.permute.xlu0 %70
  %vm73 = vcmask 64512
  %v75 = vsel %vm73, %v66, 0
  %77 = vmatpush.msra.mxu0 0.0
  %78 = vmatpush.msra.mxu0 0.0
  %79 = vmatpush.msra.mxu0 0.0
  %80 = vmatpush.msra.mxu0 0.0
  %81 = vmatpush.msra.mxu0 0.0
  %82 = vmatpush.msra.mxu0 0.0
  %83 = vmatpush.msra.mxu0 0.0
  %84 = vmatpush.msra.mxu0 0.0
  %85 = vmatpush.msra.mxu0 0.0
  %86 = vmatpush.msra.mxu0 0.0
  %87 = vmatpush.msra.mxu0 0.0
  %88 = vmatpush.msra.mxu0 0.0
  %89 = vmatpush.msra.mxu0 0.0
  %90 = vmatpush.msra.mxu0 0.0
  %91 = vmatpush.msra.mxu0 0.0
  %92 = vmatpush.msra.mxu0 %v65
  %93 = vmatmul.f32.gmra.mxu0 %v75
  %v94 = vpop.f32.mrf.mxu0
  %v95 = vadd.f32 %v71, %v94
  %96 = vdwg.mxu0
  %v97 = vmax.f32 %v95, 0.0
  %v98 = vld [vmem:[%s5] sm:$0xff]
  %v99 = vld [vmem:[%s5 + $0x8] sm:$0xff]
  %v100 = vld [vmem:[%s6] sm:$0xff]
  %v101 = vld [vmem:[%s6 + $0x8] sm:$0xff]
  %103 = vset.pattern.permute.xlu0 0
  %104 = vperm.xlu0 %103, %v100
  %v105 = vpop.permute.xlu0 %104
  %108 = vset.pattern.permute.xlu0 0
  %109 = vperm.xlu0 %108, %v101
  %v110 = vpop.permute.xlu0 %109
  %v113 = vsel %vm73, %v98, 0
  %v116 = vsel %vm73, %v99, 0
  %118 = vmatpush.msra.mxu0 0.0
  %119 = vmatpush.msra.mxu0 0.0
  %120 = vmatpush.msra.mxu0 0.0
  %121 = vmatpush.msra.mxu0 0.0
  %122 = vmatpush.msra.mxu0 0.0
  %123 = vmatpush.msra.mxu0 0.0
  %124 = vmatpush.msra.mxu0 0.0
  %125 = vmatpush.msra.mxu0 0.0
  %126 = vmatpush.msra.mxu0 0.0
  %127 = vmatpush.msra.mxu0 0.0
  %128 = vmatpush.msra.mxu0 0.0
  %129 = vmatpush.msra.mxu0 0.0
  %130 = vmatpush.msra.mxu0 0.0
  %131 = vmatpush.msra.mxu0 0.0
  %132 = vmatpush.msra.mxu0 0.0
  %133 = vmatpush.msra.mxu0 %v97
  %134 = vmatmul.f32.gmra.mxu0 %v113
  %v135 = vpop.f32.mrf.mxu0
  %v136 = vadd.f32 %v105, %v135
  %137 = vmatmul.f32.gmra.mxu0 %v116
  %v138 = vpop.f32.mrf.mxu0
  %v139 = vadd.f32 %v110, %v138
  %140 = vdwg.mxu0
  %vm141 = vcmask 31744
  %v142 = vsel %vm141, %v136, -inf
  %v143 = vsel %vm141, %v139, -inf
  %v144 = vmax.f32 %v142, %v143
  %v145 = vrot.slane %v144, 4
  %v146 = vmax.f32 %v144, %v145
  %v147 = vrot.slane %v146, 2
  %v148 = vmax.f32 %v146, %v147
  %v149 = vrot.slane %v148, 1
  %v150 = vmax.f32 %v148, %v149
  %v151 = vsub.f32 %v136, %v150
  %v152 = vsub.f32 %v139, %v150
  %v153 = vmul.f32 %v151, 1.442695
  %v154 = vpow.pop %v153
  %v155 = vmul.f32 %v152, 1.442695
  %v156 = vpow.pop %v155
  %v157 = vsel %vm141, %v154, 0.0
  %v158 = vsel %vm141, %v156, 0.0
  %v159 = vadd.f32 %v157, %v158
  %v160 = vrot.slane %v159, 4
  %v161 = vadd.f32 %v159, %v160
  %v162 = vrot.slane %v161, 2
  %v163 = vadd.f32 %v161, %v162
  %v164 = vrot.slane %v163, 1
  %v165 = vadd.f32 %v163, %v164
  %v166 = vrcp.pop %v165
  %v167 = vmul.f32 %v165, %v166
  %v168 = vsub.f32 1.0, %v167
  %v169 = vmul.f32 %v166, %v168
  %v170 = vadd.f32 %v166, %v169
  %vm171 = vweird.f32 %v165
  %vm172 = vweird.f32 %v166
  %vm173 = vmor %vm171, %vm172
  %v174 = vsel %vm173, %v166, %v170
  %v175 = vand.u32 2147483647, %v165
  %vm176 = vcmp.eq.f32.partialorder %v175, 8.507059e+37
  %v177 = vand.u32 %v165, 2147483648
  %v178 = vor.u32 1.1754944e-38, %v177
  %v179 = vsel %vm176, %v178, %v174
  %v180 = vmul.f32 %v154, %v179
  %v181 = vmul.f32 %v156, %v179
  %182 = vst.msk [vmem:[%s7] sm:$0xff] %vm141, %v180
  %183 = vst.msk [vmem:[%s7 + $0x8] sm:$0xff] %vm141, %v181
  // Predicated region
  $region30: #{tpu_custom_call.1} parent=0 // pred_check
    _
  $region31: #{tpu_custom_call.1} parent=0 // pred_check_branch
    %185 = sbr.rel (0) target = $region33
  $region32: #{tpu_custom_call.1} parent=0 // pred_region
    _
  $region33: #{tpu_custom_call.1} parent=0 // pred_fallthru
    _
  // Predicated region
  $region34: #{tpu_custom_call.1} parent=0 // pred_check
    _
  $region35: #{tpu_custom_call.1} parent=0 // pred_check_branch
    %187 = sbr.rel (0) target = $region37
  $region36: #{tpu_custom_call.1} parent=0 // pred_region
    _
  $region37: #{tpu_custom_call.1} parent=0 // pred_fallthru
    _

</llo_original>
